<compile_context>
chip_gen: v5e
topology: v5e:2x2
jax: 0.10.0
libtpu: 0.0.40
codegen_flags: <defaults>
</compile_context>

<pallas_src>
import functools
import math

import jax
import jax.numpy as jnp
from jax.experimental import pallas as pl
from jax.experimental.pallas import tpu as pltpu


def _mha_kernel(q_ref, kt_ref, v_ref, wo_ref, bo_ref, mask_ref, out_ref,
                acc_ref, *, group):
    """One (batch, q-tile, head-group) grid step.

    q_ref   : (1, G, TQ, d_k)  pre-projected, pre-scaled queries (this group)
    kt_ref  : (1, G, d_k, S)   pre-projected, pre-transposed keys
    v_ref   : (1, G, S, d_k)   pre-projected values
    wo_ref  : (H, d_k, D)      full output projection, VMEM-resident
    bo_ref  : (1, D)           effective output bias (bo + bv @ Wo), resident
    mask_ref: (1, TQ, S)       int8, nonzero = attend
    out_ref : (1, TQ, D)
    acc_ref : (TQ, D) f32 scratch -- output-proj accumulator over head groups
    """
    hg = pl.program_id(2)

    @pl.when(hg == 0)
    def _init():
        acc_ref[...] = jnp.zeros_like(acc_ref)

    # Additive mask for this (batch, q-tile).  Recomputed per head-group step:
    # VPU compare/select that hides under the MXU phase; avoids a (TQ, S) f32
    # scratch (relevant on v7x's 64 MiB VMEM).
    mvals = mask_ref[0].astype(jnp.float32)                       # (TQ, S)
    neg = jnp.where(mvals == 0.0, jnp.float32(-1e9), jnp.float32(0.0))

    q = q_ref[0]            # (G, TQ, d_k) -- 1/sqrt(d_k) folded in outside
    kt = kt_ref[0]          # (G, d_k, S)
    v = v_ref[0]            # (G, S, d_k)

    # Batched per-head scores / softmax / PV, accumulation in f32.
    s = jnp.einsum('gqd,gds->gqs', q, kt,
                   preferred_element_type=jnp.float32)            # (G, TQ, S)
    s = s + neg[None, :, :]

    m = jnp.max(s, axis=-1, keepdims=True)
    e = jnp.exp(s - m)                                            # (G, TQ, S)
    l = jnp.sum(e, axis=-1, keepdims=True)                        # (G, TQ, 1)
    # (dropout on the attention probabilities is identity in eval mode)

    ctx = jnp.einsum('gqs,gsd->gqd', e.astype(v.dtype), v,
                     preferred_element_type=jnp.float32)          # (G, TQ, dk)
    ctx = ctx * (1.0 / l)          # exact normalization (no approx recip)

    # Fold each head's context straight into the output projection.  Wo is
    # VMEM-resident; select this group's rows with a dynamic first-axis index.
    for g in range(group):         # static unroll
        acc_ref[...] += jnp.dot(ctx[g].astype(wo_ref.dtype),
                                wo_ref[hg * group + g],
                                preferred_element_type=jnp.float32)

    @pl.when(hg == pl.num_programs(2) - 1)
    def _finalize():
        out_ref[0] = (acc_ref[...] + bo_ref[...]).astype(out_ref.dtype)


def _pick_q_tile(s, cap=256):
    """Largest divisor of s that is <= cap and a multiple of 8 (or s itself)."""
    for t in range(min(s, cap), 0, -1):
        if s % t == 0 and (t % 8 == 0 or t == s):
            return t
    return s


def multi_headed_attention(query, key, value, mask, weights, biases,
                           *, num_heads, q_tile=None, head_group=None):
    """query/key/value: (B, S, D); mask: (B, S, S), nonzero = attend.
    weights: (4, D, D), each slice stored transposed so y = x @ w[i] + b[i]
    (order: q, k, v, out).  biases: (4, D)."""
    B, S, D = query.shape
    assert D % num_heads == 0, "input_dim must be a multiple of num_heads"
    H = num_heads
    d_k = D // H
    scale = 1.0 / math.sqrt(d_k)

    TQ = q_tile if q_tile is not None else _pick_q_tile(S, 256)
    assert S % TQ == 0, "seq len must be a multiple of the q tile"
    n_qt = S // TQ

    # Head grouping: process G heads per innermost grid step (widens the
    # per-step matmul work, cuts grid-step / DMA overhead).
    if head_group is None:
        G = 1
        for g in range(H, 0, -1):
            if H % g == 0 and g * d_k <= 256:
                G = g
                break
    else:
        G = head_group
    assert H % G == 0
    HG = H // G

    # ---- pure-JAX pre-work (single full-width XLA GEMMs, near-peak MXU) ----
    # Projections are computed ONCE here instead of once per q-tile inside the
    # kernel.  K bias is dropped (softmax is invariant to it) and the V bias
    # is folded into the output bias: bo' = bo + bv @ Wo (exact, since softmax
    # rows sum to 1).  The 1/sqrt(d_k) scale is folded into Q.
    q_p = (query @ weights[0] + biases[0]) * scale               # (B, S, D)
    k_p = key @ weights[1]                                        # (B, S, D)
    v_p = value @ weights[2]                                      # (B, S, D)

    qh = q_p.reshape(B, S, H, d_k).transpose(0, 2, 1, 3)          # (B,H,S,dk)
    kth = k_p.reshape(B, S, H, d_k).transpose(0, 2, 3, 1)         # (B,H,dk,S)
    vh = v_p.reshape(B, S, H, d_k).transpose(0, 2, 1, 3)          # (B,H,S,dk)

    wo = weights[3].reshape(H, d_k, D)                            # per-head Wo
    bo_eff = (biases[3] + biases[2] @ weights[3]).reshape(1, D)
    mask8 = (mask != 0).astype(jnp.int8)        # 4x less mask DMA than int32

    grid = (B, n_qt, HG)

    it = jnp.dtype(query.dtype).itemsize
    wt = jnp.dtype(weights.dtype).itemsize
    # Explicit VMEM budget: double-buffered blocks + resident weights/bias +
    # accumulator scratch, with 2x headroom (review item 3).
    vmem_need = (
        2 * (G * TQ * d_k * it)            # q block
        + 2 * (G * d_k * S * it)           # kT block
        + 2 * (G * S * d_k * it)           # v block
        + 2 * (TQ * S * 1)                 # int8 mask block
        + 2 * (TQ * D * it)                # out block
        + 2 * (H * d_k * D * wt + D * wt)  # resident wo + bo
        + TQ * D * 4                       # f32 accumulator scratch
    )
    vmem_limit = int(min(max(2 * vmem_need, 32 * 1024 * 1024),
                         128 * 1024 * 1024))

    grid_spec = pltpu.PrefetchScalarGridSpec(
        num_scalar_prefetch=0,
        grid=grid,
        in_specs=[
            pl.BlockSpec((1, G, TQ, d_k), lambda b, qi, hg: (b, hg, qi, 0)),  # q
            pl.BlockSpec((1, G, d_k, S),  lambda b, qi, hg: (b, hg, 0, 0)),   # kT
            pl.BlockSpec((1, G, S, d_k),  lambda b, qi, hg: (b, hg, 0, 0)),   # v
            pl.BlockSpec((H, d_k, D),     lambda b, qi, hg: (0, 0, 0)),       # wo (resident)
            pl.BlockSpec((1, D),          lambda b, qi, hg: (0, 0)),          # bo' (resident)
            pl.BlockSpec((1, TQ, S),      lambda b, qi, hg: (b, qi, 0)),      # mask
        ],
        out_specs=pl.BlockSpec((1, TQ, D), lambda b, qi, hg: (b, qi, 0)),
        scratch_shapes=[
            pltpu.VMEM((TQ, D), jnp.float32),   # output-proj accumulator
        ],
    )

    # Cost of the work actually executed inside the kernel (projections and
    # out-proj bias folding run outside in XLA).
    cost = pl.CostEstimate(
        flops=int(B * (4 * S * S * D + 2 * S * D * D)),
        transcendentals=int(B * H * S * S),
        bytes_accessed=int((1 + 2 * n_qt) * B * S * D * it    # q once, k/v per q-tile
                           + B * S * S                        # int8 mask
                           + D * D * wt                       # resident Wo
                           + B * S * D * it),                 # output
    )

    return pl.pallas_call(
        functools.partial(_mha_kernel, group=G),
        out_shape=jax.ShapeDtypeStruct((B, S, D), query.dtype),
        grid_spec=grid_spec,
        compiler_params=pltpu.CompilerParams(
            # batch & q-tile axes shard across TensorCores (keep B*n_qt >= 2);
            # the head-group axis is a reduction into the resident out block.
            dimension_semantics=("parallel", "parallel", "arbitrary"),
            vmem_limit_bytes=vmem_limit),
        cost_estimate=cost,
    )(qh, kth, vh, wo, bo_eff, mask8)


def _reference(query, key, value, mask, weights, biases, *, num_heads):
    """Pure-JAX reference mirroring the PyTorch module (eval mode)."""
    B, S, D = query.shape
    d_k = D // num_heads

    def proj(x, i):
        return x @ weights[i] + biases[i]

    def split_heads(x):
        return x.reshape(B, S, num_heads, d_k).transpose(0, 2, 1, 3)

    q = split_heads(proj(query, 0))
    k = split_heads(proj(key, 1))
    v = split_heads(proj(value, 2))
    scores = jnp.einsum("bhqd,bhkd->bhqk", q, k) / math.sqrt(d_k)
    scores = jnp.where(mask[:, None, :, :] == 0, -1e9, scores)
    p = jax.nn.softmax(scores, axis=-1)
    ctx = jnp.einsum("bhqk,bhkd->bhqd", p, v)
    ctx = ctx.transpose(0, 2, 1, 3).reshape(B, S, D)
    return ctx @ weights[3] + biases[3]


if __name__ == "__main__":
    B, S, D, H = 2, 8, 32, 4   # batch, seq, hidden, heads (d_k = 8)

    key0 = jax.random.PRNGKey(0)
    k_q, k_k, k_v, k_w, k_b, k_m = jax.random.split(key0, 6)

    query = jax.random.normal(k_q, (B, S, D), dtype=jnp.float32)
    keyx = jax.random.normal(k_k, (B, S, D), dtype=jnp.float32)
    value = jax.random.normal(k_v, (B, S, D), dtype=jnp.float32)

    # Deterministic parameters (shapes from nn.Linear(D, D) x 4), stored
    # pre-transposed so the math is y = x @ W + b directly.
    bound = 1.0 / math.sqrt(D)
    weights = jax.random.uniform(k_w, (4, D, D), dtype=jnp.float32,
                                 minval=-bound, maxval=bound)
    biases = jax.random.uniform(k_b, (4, D), dtype=jnp.float32,
                                minval=-bound, maxval=bound)

    # Padding-style mask: 1 = attend, 0 = masked out.
    mask = (jax.random.uniform(k_m, (B, S, S)) > 0.2).astype(jnp.int32)
    mask = mask.at[:, :, 0].set(1)   # every query row attends to >= 1 key

    out = multi_headed_attention(query, keyx, value, mask, weights, biases,
                                 num_heads=H)
    out = jax.block_until_ready(out)

    ref = _reference(query, keyx, value, mask, weights, biases, num_heads=H)
    assert out.shape == (B, S, D)
    # Everything accumulates in f32 and the softmax normalization is exact;
    # the remaining differences are reassociation (pre-projection outside the
    # kernel, K-bias drop / V-bias fold, additive vs. filled mask).
    assert jnp.allclose(out, ref, atol=1e-3, rtol=1e-3), "mismatch vs reference"

    print("KERNEL_OK")
</pallas_src>

<mosaic_0001>
module attributes {stable_mosaic.version = 11 : i64} {
  func.func @_mha_kernel(%arg0: i32, %arg1: i32, %arg2: i32, %arg3: memref<1x4x8x8xf32, #tpu.memory_space<vmem>>, %arg4: memref<1x4x8x8xf32, #tpu.memory_space<vmem>>, %arg5: memref<1x4x8x8xf32, #tpu.memory_space<vmem>>, %arg6: memref<4x8x32xf32, #tpu.memory_space<vmem>>, %arg7: memref<1x32xf32, #tpu.memory_space<vmem>>, %arg8: memref<1x8x8xi8, #tpu.memory_space<vmem>>, %arg9: memref<1x8x32xf32, #tpu.memory_space<vmem>>, %arg10: memref<8x32xf32, #tpu.memory_space<vmem>>) attributes {dimension_semantics = [#tpu.dimension_semantics<parallel>, #tpu.dimension_semantics<parallel>, #tpu.dimension_semantics<arbitrary>], iteration_bounds = array<i64: 2, 1, 1>, scalar_prefetch = 0 : i64, scratch_operands = 1 : i64, tpu.core_type = #tpu.core_type<tc>, window_params = [{transform_indices = @transform_0, window_bounds = array<i64: 1, 4, 8, 8>}, {transform_indices = @transform_1, window_bounds = array<i64: 1, 4, 8, 8>}, {transform_indices = @transform_2, window_bounds = array<i64: 1, 4, 8, 8>}, {pipeline_mode = #tpu.pipeline_mode<synchronous>, transform_indices = @transform_3, window_bounds = array<i64: 4, 8, 32>}, {pipeline_mode = #tpu.pipeline_mode<synchronous>, transform_indices = @transform_4, window_bounds = array<i64: 1, 32>}, {transform_indices = @transform_5, window_bounds = array<i64: 1, 8, 8>}, {transform_indices = @transform_6, window_bounds = array<i64: 1, 8, 32>}]} {
    %c0_i32 = arith.constant 0 : i32
    %0 = arith.cmpi eq, %arg2, %c0_i32 : i32
    %1 = arith.extui %0 : i1 to i32
    %c0_i32_0 = arith.constant 0 : i32
    %2 = arith.cmpi ne, %1, %c0_i32_0 : i32
    scf.if %2 {
      %cst_56 = arith.constant 0.000000e+00 : f32
      %80 = vector.broadcast %cst_56 : f32 to vector<8x32xf32>
      %c0_57 = arith.constant 0 : index
      %c0_58 = arith.constant 0 : index
      %81 = vector.load %arg10[%c0_57, %c0_58] : memref<8x32xf32, #tpu.memory_space<vmem>>, vector<8x32xf32>
      tpu.vector_store %arg10[%c0_57, %c0_58], %80 {strides = array<i32>} : memref<8x32xf32, #tpu.memory_space<vmem>>, vector<8x32xf32>,
    } else {
    }
    %c0 = arith.constant 0 : index
    %c0_1 = arith.constant 0 : index
    %c0_2 = arith.constant 0 : index
    %3 = vector.load %arg8[%c0, %c0_1, %c0_2] : memref<1x8x8xi8, #tpu.memory_space<vmem>>, vector<1x8x8xi8>
    %4 = vector.shape_cast %3 : vector<1x8x8xi8> to vector<8x8xi8>
    %5 = arith.sitofp %4 : vector<8x8xi8> to vector<8x8xf32>
    %cst = arith.constant 0.000000e+00 : f32
    %6 = vector.broadcast %cst : f32 to vector<8x8xf32>
    %7 = arith.cmpf oeq, %5, %6 : vector<8x8xf32>
    %cst_3 = arith.constant -1.000000e+09 : f32
    %cst_4 = arith.constant 0.000000e+00 : f32
    %8 = vector.broadcast %cst_3 : f32 to vector<8x8xf32>
    %9 = vector.broadcast %cst_4 : f32 to vector<8x8xf32>
    %10 = arith.select %7, %8, %9 : vector<8x8xi1>, vector<8x8xf32>
    %c0_5 = arith.constant 0 : index
    %c0_6 = arith.constant 0 : index
    %c0_7 = arith.constant 0 : index
    %c0_8 = arith.constant 0 : index
    %11 = vector.load %arg3[%c0_5, %c0_6, %c0_7, %c0_8] : memref<1x4x8x8xf32, #tpu.memory_space<vmem>>, vector<1x4x8x8xf32>
    %12 = vector.shape_cast %11 : vector<1x4x8x8xf32> to vector<4x8x8xf32>
    %c0_9 = arith.constant 0 : index
    %c0_10 = arith.constant 0 : index
    %c0_11 = arith.constant 0 : index
    %c0_12 = arith.constant 0 : index
    %13 = vector.load %arg4[%c0_9, %c0_10, %c0_11, %c0_12] : memref<1x4x8x8xf32, #tpu.memory_space<vmem>>, vector<1x4x8x8xf32>
    %14 = vector.shape_cast %13 : vector<1x4x8x8xf32> to vector<4x8x8xf32>
    %c0_13 = arith.constant 0 : index
    %c0_14 = arith.constant 0 : index
    %c0_15 = arith.constant 0 : index
    %c0_16 = arith.constant 0 : index
    %15 = vector.load %arg5[%c0_13, %c0_14, %c0_15, %c0_16] : memref<1x4x8x8xf32, #tpu.memory_space<vmem>>, vector<1x4x8x8xf32>
    %16 = vector.shape_cast %15 : vector<1x4x8x8xf32> to vector<4x8x8xf32>
    "tpu.trace_start"() <{level = 10 : i32, message = "gqd,gds->gqs"}> : () -> ()
    %cst_17 = arith.constant dense<0.000000e+00> : vector<4x8x8xf32>
    %17 = tpu.matmul %12, %14, %cst_17 {dimension_numbers = #tpu.dot_dimension_numbers<[2], [1], [1], [2], [0, 0, 0, 1, 1, 2], [0], [0]>} : vector<4x8x8xf32>, vector<4x8x8xf32>, vector<4x8x8xf32> -> vector<4x8x8xf32>
    "tpu.trace_stop"() : () -> ()
    %18 = vector.shape_cast %10 : vector<8x8xf32> to vector<1x8x8xf32>
    %19 = vector.broadcast %18 : vector<1x8x8xf32> to vector<4x8x8xf32>
    %20 = arith.addf %17, %19 : vector<4x8x8xf32>
    %cst_18 = arith.constant dense<0xFF800000> : vector<4x8xf32>
    %21 = vector.multi_reduction <maximumf>, %20, %cst_18 [2] : vector<4x8x8xf32> to vector<4x8xf32>
    %22 = vector.shape_cast %21 : vector<4x8xf32> to vector<4x8x1xf32>
    %23 = vector.broadcast %22 : vector<4x8x1xf32> to vector<4x8x8xf32>
    %24 = arith.subf %20, %23 : vector<4x8x8xf32>
    %25 = math.exp %24 : vector<4x8x8xf32>
    %cst_19 = arith.constant dense<0.000000e+00> : vector<4x8xf32>
    %26 = vector.multi_reduction <add>, %25, %cst_19 [2] : vector<4x8x8xf32> to vector<4x8xf32>
    %27 = vector.shape_cast %26 : vector<4x8xf32> to vector<4x8x1xf32>
    "tpu.trace_start"() <{level = 10 : i32, message = "gqs,gsd->gqd"}> : () -> ()
    %cst_20 = arith.constant dense<0.000000e+00> : vector<4x8x8xf32>
    %28 = tpu.matmul %25, %16, %cst_20 {dimension_numbers = #tpu.dot_dimension_numbers<[2], [1], [1], [2], [0, 0, 0, 1, 1, 2], [0], [0]>} : vector<4x8x8xf32>, vector<4x8x8xf32>, vector<4x8x8xf32> -> vector<4x8x8xf32>
    "tpu.trace_stop"() : () -> ()
    %cst_21 = arith.constant 1.000000e+00 : f32
    %29 = vector.broadcast %cst_21 : f32 to vector<4x8x1xf32>
    %30 = arith.divf %29, %27 : vector<4x8x1xf32>
    %31 = vector.broadcast %30 : vector<4x8x1xf32> to vector<4x8x8xf32>
    %32 = arith.mulf %28, %31 : vector<4x8x8xf32>
    %c0_22 = arith.constant 0 : index
    %c0_23 = arith.constant 0 : index
    %33 = vector.load %arg10[%c0_22, %c0_23] : memref<8x32xf32, #tpu.memory_space<vmem>>, vector<8x32xf32>
    %34 = vector.extract_strided_slice %32 {offsets = [0, 0, 0], sizes = [1, 8, 8], strides = [1, 1, 1]} : vector<4x8x8xf32> to vector<1x8x8xf32>
    %35 = vector.shape_cast %34 : vector<1x8x8xf32> to vector<8x8xf32>
    %c4_i32 = arith.constant 4 : i32
    %36 = arith.muli %arg2, %c4_i32 : i32
    %c0_i32_24 = arith.constant 0 : i32
    %37 = arith.addi %36, %c0_i32_24 : i32
    %38 = arith.index_cast %37 : i32 to index
    %c0_25 = arith.constant 0 : index
    %c0_26 = arith.constant 0 : index
    %39 = vector.load %arg6[%38, %c0_25, %c0_26] : memref<4x8x32xf32, #tpu.memory_space<vmem>>, vector<1x8x32xf32>
    %40 = vector.shape_cast %39 : vector<1x8x32xf32> to vector<8x32xf32>
    %cst_27 = arith.constant dense<0.000000e+00> : vector<8x32xf32>
    %41 = tpu.matmul %35, %40, %cst_27 {dimension_numbers = #tpu.dot_dimension_numbers<[1], [0], [0], [1], [0, 0, 1, 1], [], []>} : vector<8x8xf32>, vector<8x32xf32>, vector<8x32xf32> -> vector<8x32xf32>
    %42 = arith.addf %33, %41 : vector<8x32xf32>
    %c0_28 = arith.constant 0 : index
    %c0_29 = arith.constant 0 : index
    %43 = vector.load %arg10[%c0_28, %c0_29] : memref<8x32xf32, #tpu.memory_space<vmem>>, vector<8x32xf32>
    tpu.vector_store %arg10[%c0_28, %c0_29], %42 {strides = array<i32>} : memref<8x32xf32, #tpu.memory_space<vmem>>, vector<8x32xf32>,
    %c0_30 = arith.constant 0 : index
    %c0_31 = arith.constant 0 : index
    %44 = vector.load %arg10[%c0_30, %c0_31] : memref<8x32xf32, #tpu.memory_space<vmem>>, vector<8x32xf32>
    %45 = vector.extract_strided_slice %32 {offsets = [1, 0, 0], sizes = [1, 8, 8], strides = [1, 1, 1]} : vector<4x8x8xf32> to vector<1x8x8xf32>
    %46 = vector.shape_cast %45 : vector<1x8x8xf32> to vector<8x8xf32>
    %c4_i32_32 = arith.constant 4 : i32
    %47 = arith.muli %arg2, %c4_i32_32 : i32
    %c1_i32 = arith.constant 1 : i32
    %48 = arith.addi %47, %c1_i32 : i32
    %49 = arith.index_cast %48 : i32 to index
    %c0_33 = arith.constant 0 : index
    %c0_34 = arith.constant 0 : index
    %50 = vector.load %arg6[%49, %c0_33, %c0_34] : memref<4x8x32xf32, #tpu.memory_space<vmem>>, vector<1x8x32xf32>
    %51 = vector.shape_cast %50 : vector<1x8x32xf32> to vector<8x32xf32>
    %cst_35 = arith.constant dense<0.000000e+00> : vector<8x32xf32>
    %52 = tpu.matmul %46, %51, %cst_35 {dimension_numbers = #tpu.dot_dimension_numbers<[1], [0], [0], [1], [0, 0, 1, 1], [], []>} : vector<8x8xf32>, vector<8x32xf32>, vector<8x32xf32> -> vector<8x32xf32>
    %53 = arith.addf %44, %52 : vector<8x32xf32>
    %c0_36 = arith.constant 0 : index
    %c0_37 = arith.constant 0 : index
    %54 = vector.load %arg10[%c0_36, %c0_37] : memref<8x32xf32, #tpu.memory_space<vmem>>, vector<8x32xf32>
    tpu.vector_store %arg10[%c0_36, %c0_37], %53 {strides = array<i32>} : memref<8x32xf32, #tpu.memory_space<vmem>>, vector<8x32xf32>,
    %c0_38 = arith.constant 0 : index
    %c0_39 = arith.constant 0 : index
    %55 = vector.load %arg10[%c0_38, %c0_39] : memref<8x32xf32, #tpu.memory_space<vmem>>, vector<8x32xf32>
    %56 = vector.extract_strided_slice %32 {offsets = [2, 0, 0], sizes = [1, 8, 8], strides = [1, 1, 1]} : vector<4x8x8xf32> to vector<1x8x8xf32>
    %57 = vector.shape_cast %56 : vector<1x8x8xf32> to vector<8x8xf32>
    %c4_i32_40 = arith.constant 4 : i32
    %58 = arith.muli %arg2, %c4_i32_40 : i32
    %c2_i32 = arith.constant 2 : i32
    %59 = arith.addi %58, %c2_i32 : i32
    %60 = arith.index_cast %59 : i32 to index
    %c0_41 = arith.constant 0 : index
    %c0_42 = arith.constant 0 : index
    %61 = vector.load %arg6[%60, %c0_41, %c0_42] : memref<4x8x32xf32, #tpu.memory_space<vmem>>, vector<1x8x32xf32>
    %62 = vector.shape_cast %61 : vector<1x8x32xf32> to vector<8x32xf32>
    %cst_43 = arith.constant dense<0.000000e+00> : vector<8x32xf32>
    %63 = tpu.matmul %57, %62, %cst_43 {dimension_numbers = #tpu.dot_dimension_numbers<[1], [0], [0], [1], [0, 0, 1, 1], [], []>} : vector<8x8xf32>, vector<8x32xf32>, vector<8x32xf32> -> vector<8x32xf32>
    %64 = arith.addf %55, %63 : vector<8x32xf32>
    %c0_44 = arith.constant 0 : index
    %c0_45 = arith.constant 0 : index
    %65 = vector.load %arg10[%c0_44, %c0_45] : memref<8x32xf32, #tpu.memory_space<vmem>>, vector<8x32xf32>
    tpu.vector_store %arg10[%c0_44, %c0_45], %64 {strides = array<i32>} : memref<8x32xf32, #tpu.memory_space<vmem>>, vector<8x32xf32>,
    %c0_46 = arith.constant 0 : index
    %c0_47 = arith.constant 0 : index
    %66 = vector.load %arg10[%c0_46, %c0_47] : memref<8x32xf32, #tpu.memory_space<vmem>>, vector<8x32xf32>
    %67 = vector.extract_strided_slice %32 {offsets = [3, 0, 0], sizes = [1, 8, 8], strides = [1, 1, 1]} : vector<4x8x8xf32> to vector<1x8x8xf32>
    %68 = vector.shape_cast %67 : vector<1x8x8xf32> to vector<8x8xf32>
    %c4_i32_48 = arith.constant 4 : i32
    %69 = arith.muli %arg2, %c4_i32_48 : i32
    %c3_i32 = arith.constant 3 : i32
    %70 = arith.addi %69, %c3_i32 : i32
    %71 = arith.index_cast %70 : i32 to index
    %c0_49 = arith.constant 0 : index
    %c0_50 = arith.constant 0 : index
    %72 = vector.load %arg6[%71, %c0_49, %c0_50] : memref<4x8x32xf32, #tpu.memory_space<vmem>>, vector<1x8x32xf32>
    %73 = vector.shape_cast %72 : vector<1x8x32xf32> to vector<8x32xf32>
    %cst_51 = arith.constant dense<0.000000e+00> : vector<8x32xf32>
    %74 = tpu.matmul %68, %73, %cst_51 {dimension_numbers = #tpu.dot_dimension_numbers<[1], [0], [0], [1], [0, 0, 1, 1], [], []>} : vector<8x8xf32>, vector<8x32xf32>, vector<8x32xf32> -> vector<8x32xf32>
    %75 = arith.addf %66, %74 : vector<8x32xf32>
    %c0_52 = arith.constant 0 : index
    %c0_53 = arith.constant 0 : index
    %76 = vector.load %arg10[%c0_52, %c0_53] : memref<8x32xf32, #tpu.memory_space<vmem>>, vector<8x32xf32>
    tpu.vector_store %arg10[%c0_52, %c0_53], %75 {strides = array<i32>} : memref<8x32xf32, #tpu.memory_space<vmem>>, vector<8x32xf32>,
    %c0_i32_54 = arith.constant 0 : i32
    %77 = arith.cmpi eq, %arg2, %c0_i32_54 : i32
    %78 = arith.extui %77 : i1 to i32
    %c0_i32_55 = arith.constant 0 : i32
    %79 = arith.cmpi ne, %78, %c0_i32_55 : i32
    scf.if %79 {
      %c0_56 = arith.constant 0 : index
      %c0_57 = arith.constant 0 : index
      %80 = vector.load %arg10[%c0_56, %c0_57] : memref<8x32xf32, #tpu.memory_space<vmem>>, vector<8x32xf32>
      %c0_58 = arith.constant 0 : index
      %c0_59 = arith.constant 0 : index
      %81 = vector.load %arg7[%c0_58, %c0_59] : memref<1x32xf32, #tpu.memory_space<vmem>>, vector<1x32xf32>
      %82 = vector.broadcast %81 : vector<1x32xf32> to vector<8x32xf32>
      %83 = arith.addf %80, %82 : vector<8x32xf32>
      %c0_60 = arith.constant 0 : index
      %c0_61 = arith.constant 0 : index
      %c0_62 = arith.constant 0 : index
      %84 = vector.load %arg9[%c0_60, %c0_61, %c0_62] : memref<1x8x32xf32, #tpu.memory_space<vmem>>, vector<1x8x32xf32>
      %85 = vector.shape_cast %84 : vector<1x8x32xf32> to vector<8x32xf32>
      %86 = vector.shape_cast %83 : vector<8x32xf32> to vector<1x8x32xf32>
      tpu.vector_store %arg9[%c0_60, %c0_61, %c0_62], %86 {strides = array<i32>} : memref<1x8x32xf32, #tpu.memory_space<vmem>>, vector<1x8x32xf32>,
    } else {
    }
    return
  }
  func.func @transform_0(%arg0: i32, %arg1: i32, %arg2: i32) -> (i32, i32, i32, i32) {
    %c0_i32 = arith.constant 0 : i32
    %c0_i32_0 = arith.constant 0 : i32
    return %arg0, %arg2, %arg1, %c0_i32 : i32, i32, i32, i32
  }
  func.func @transform_1(%arg0: i32, %arg1: i32, %arg2: i32) -> (i32, i32, i32, i32) {
    %c0_i32 = arith.constant 0 : i32
    %c0_i32_0 = arith.constant 0 : i32
    %c0_i32_1 = arith.constant 0 : i32
    return %arg0, %arg2, %c0_i32, %c0_i32_0 : i32, i32, i32, i32
  }
  func.func @transform_2(%arg0: i32, %arg1: i32, %arg2: i32) -> (i32, i32, i32, i32) {
    %c0_i32 = arith.constant 0 : i32
    %c0_i32_0 = arith.constant 0 : i32
    %c0_i32_1 = arith.constant 0 : i32
    return %arg0, %arg2, %c0_i32, %c0_i32_0 : i32, i32, i32, i32
  }
  func.func @transform_3(%arg0: i32, %arg1: i32, %arg2: i32) -> (i32, i32, i32) {
    %c0_i32 = arith.constant 0 : i32
    %c0_i32_0 = arith.constant 0 : i32
    %c0_i32_1 = arith.constant 0 : i32
    %c0_i32_2 = arith.constant 0 : i32
    return %c0_i32, %c0_i32_0, %c0_i32_1 : i32, i32, i32
  }
  func.func @transform_4(%arg0: i32, %arg1: i32, %arg2: i32) -> (i32, i32) {
    %c0_i32 = arith.constant 0 : i32
    %c0_i32_0 = arith.constant 0 : i32
    %c0_i32_1 = arith.constant 0 : i32
    return %c0_i32, %c0_i32_0 : i32, i32
  }
  func.func @transform_5(%arg0: i32, %arg1: i32, %arg2: i32) -> (i32, i32, i32) {
    %c0_i32 = arith.constant 0 : i32
    %c0_i32_0 = arith.constant 0 : i32
    return %arg0, %arg1, %c0_i32 : i32, i32, i32
  }
  func.func @transform_6(%arg0: i32, %arg1: i32, %arg2: i32) -> (i32, i32, i32) {
    %c0_i32 = arith.constant 0 : i32
    %c0_i32_0 = arith.constant 0 : i32
    return %arg0, %arg1, %c0_i32 : i32, i32, i32
  }
}

</mosaic_0001>

<llo_original>
// kernel: tpu_custom_call.1
$region0: #{tpu_custom_call.1}
  #allocation0 [shape = 'u32[]', space=smem, size = 0x4, offset = 0x4, fixed_abs, tag = 'smem constant byte address 0x4 - core index']
  #allocation1 [shape = 'u32[72,128]{1,0:T(1,128)}', space=vmem, size = 0x9000, scoped, tag = 'internal scratch']
  #allocation2 [shape = 'f32[8,32]{1,0:T(8,128)}', space=vmem, size = 0x1000, scoped, tag = 'scratch operand']
  %s0 = inlined_call_operand.hbm [shape: f32[2,4,8,8], index: 0, kind: input, shape index: {}]
  %s1 = inlined_call_operand.hbm [shape: f32[2,4,8,8], index: 1, kind: input, shape index: {}]
  %s2 = inlined_call_operand.hbm [shape: f32[2,4,8,8], index: 2, kind: input, shape index: {}]
  %s3 = inlined_call_operand.hbm [shape: f32[4,8,32], index: 3, kind: input, shape index: {}]
  %s4 = inlined_call_operand.hbm [shape: f32[1,32], index: 4, kind: input, shape index: {}]
  %s5 = inlined_call_operand.vmem [shape: s8[2,8,8], index: 5, kind: input, shape index: {}]
  %s6 = inlined_call_operand.hbm [shape: f32[2,8,32], index: 6, kind: output, shape index: {}]
  %s7 = sld [smem:[#allocation0]]
  $region85: #{tpu_custom_call.1} parent=0
    _
  %s9 = ssub.s32 1, %s7
  %s10 = scalar_select 0, %s9, %s7
  $region1: #{tpu_custom_call.1} parent=0
    #allocation3 [shape = 'u8[32768]{0}', space=vmem, size = 0x8000, scoped, tag = 'input window, operand 0']
    #allocation4 [shape = 's32[2]{0}', space=sflag, size = 0x8, scoped, tag = 'scoped memory for tpu_custom_call.1']
    #allocation5 [shape = 's32[2]{0}', space=sflag, size = 0x8, scoped, tag = 'scoped memory for tpu_custom_call.1']
    #allocation6 [shape = 'u8[32768]{0}', space=vmem, size = 0x8000, scoped, tag = 'input window, operand 1']
    #allocation7 [shape = 's32[2]{0}', space=sflag, size = 0x8, scoped, tag = 'scoped memory for tpu_custom_call.1']
    #allocation8 [shape = 'u8[32768]{0}', space=vmem, size = 0x8000, scoped, tag = 'input window, operand 2']
    #allocation9 [shape = 'u8[16384]{0}', space=vmem, size = 0x4000, scoped, tag = 'input window, operand 3, single buffered']
    #allocation10 [shape = 's32[1]{0}', space=sflag, size = 0x4, scoped, tag = 'scoped memory for tpu_custom_call.1']
    #allocation11 [shape = 'u8[512]{0}', space=vmem, size = 0x400, scoped, tag = 'input window, operand 4, single buffered']
    #allocation12 [shape = 'u8[8192]{0}', space=vmem, size = 0x2000, scoped, tag = 'output window, operand 0']
    %11 = vsyncpa [#allocation4], 0
    %s12 = scalar_lea.sflag [#allocation4], 1
    %13 = vsyncpa %s12, 0
    %14 = vsyncpa [#allocation7], 0
    %s15 = scalar_lea.sflag [#allocation7], 1
    %16 = vsyncpa %s15, 0
    %17 = vsyncpa [#allocation10], 0
    %18 = vsyncpa [#allocation5], 0
    %s19 = scalar_lea.sflag [#allocation5], 1
    %20 = vsyncpa %s19, 0
    loop: start=0, step=1, limit=4
    $region2: #{tpu_custom_call.1} parent=1 // loop_pre_header
      _
    $region3: #{tpu_custom_call.1} parent=1 // loop_header
      %s22 = sphi 0, %s26
      %p23 = scmp.ge.s32.totalorder %s22, 4
      %s29 = sphi 0, %s48
      %s30 = sphi 0, %s44
      %s31 = sphi 0, %s40
      %s32 = sphi 0, %s29
      %s33 = sphi 0, %s30
      %s34 = sphi 0, %s31
      %s35 = sphi 0, %s32
      %s36 = sphi 0, %s33
      %s37 = sphi 0, %s34
      %s55 = sphi 0, %s57
      %s58 = sphi 0, %s55
      %s59 = sphi 0, %s58
      %s75 = sphi 0, %s59
      %s83 = sphi 0, %s85
      %s86 = sphi 0, %s83
      %s87 = sphi 0, %s86
      %s103 = sphi 0, %s87
      %s111 = sphi 0, %s113
      %s114 = sphi 0, %s111
      %s115 = sphi 0, %s114
      %s131 = sphi 0, %s115
      %s135 = sphi 0, %s135
      %s137 = sphi 0, %s135
      %s138 = sphi 0, %s137
      %s152 = sphi 0, %s138
      %s156 = sphi 0, %s156
      %s158 = sphi 0, %s156
      %s159 = sphi 0, %s158
      %s173 = sphi 0, %s159
      %s181 = sphi 0, %s183
      %s184 = sphi 0, %s181
      %s185 = sphi 0, %s184
      %s201 = sphi 0, %s185
      %s209 = sphi 0, %s211
      %s212 = sphi 0, %s209
      %s213 = sphi 0, %s212
      %s229 = sphi 0, %s213
    $region4: #{tpu_custom_call.1} parent=1 // loop_header_branch
      %25 = sbr.rel (%p23) target = $region8
    $region5: #{tpu_custom_call.1} parent=1 // loop_body
      %s27 = ssub.s32 %s22, 1
      %s28 = ssub.s32 %s22, 2
      %s38 = sadd.s32 1, %s31
      %p39 = scmp.ge.s32.totalorder %s38, 1
      %s40 = scalar_select %p39, 0, %s38
      %s41 = sadd.s32 1, %s30
      %s42 = scalar_select %p39, %s41, %s30
      %p43 = scmp.ge.s32.totalorder %s42, 1
      %s44 = scalar_select %p43, 0, %s42
      %s45 = sadd.s32 1, %s29
      %s46 = scalar_select %p43, %s45, %s29
      %p47 = scmp.ge.s32.totalorder %s46, 2
      %s48 = scalar_select %p47, 0, %s46
      %s49 = ssub.s32 %s29, %s48
      %s50 = ssub.s32 %s31, %s40
      %s51 = sor.u32 %s49, %s50
      %s52 = ssub.s32 %s30, %s44
      %s53 = sor.u32 %s51, %s52
      %p54 = scmp.eq.s32.totalorder %s53, 0
      %s56 = sadd.s32 %s55, 1
      %s57 = scalar_select %p54, %s55, %s56
      %p60 = pneg %p54
      %p61 = scmp.eq.s32.totalorder %s22, 1
      %p62 = por %p60, %p61
      %p63 = scmp.ne.s32.totalorder %s55, %s58
      %p64 = scmp.eq.s32.totalorder %s22, 0
      %p65 = por %p63, %p64
      %p66 = scmp.ne.s32.totalorder %s55, %s58
      %p67 = scmp.eq.s32.totalorder %s27, 1
      %p68 = por %p66, %p67
      %p69 = scmp.ne.s32.totalorder %s58, %s59
      %p70 = scmp.eq.s32.totalorder %s27, 0
      %p71 = por %p69, %p70
      %p72 = scmp.ne.s32.totalorder %s58, %s59
      %p73 = scmp.eq.s32.totalorder %s28, 1
      %p74 = por %p72, %p73
      %p76 = scmp.ne.s32.totalorder %s59, %s75
      %p77 = scmp.eq.s32.totalorder %s28, 0
      %p78 = por %p76, %p77
      %s79 = ssub.s32 %s29, %s48
      %s80 = ssub.s32 %s31, %s40
      %s81 = sor.u32 %s79, %s80
      %p82 = scmp.eq.s32.totalorder %s81, 0
      %s84 = sadd.s32 %s83, 1
      %s85 = scalar_select %p82, %s83, %s84
      %p88 = pneg %p82
      %p89 = scmp.eq.s32.totalorder %s22, 1
      %p90 = por %p88, %p89
      %p91 = scmp.ne.s32.totalorder %s83, %s86
      %p92 = scmp.eq.s32.totalorder %s22, 0
      %p93 = por %p91, %p92
      %p94 = scmp.ne.s32.totalorder %s83, %s86
      %p95 = scmp.eq.s32.totalorder %s27, 1
      %p96 = por %p94, %p95
      %p97 = scmp.ne.s32.totalorder %s86, %s87
      %p98 = scmp.eq.s32.totalorder %s27, 0
      %p99 = por %p97, %p98
      %p100 = scmp.ne.s32.totalorder %s86, %s87
      %p101 = scmp.eq.s32.totalorder %s28, 1
      %p102 = por %p100, %p101
      %p104 = scmp.ne.s32.totalorder %s87, %s103
      %p105 = scmp.eq.s32.totalorder %s28, 0
      %p106 = por %p104, %p105
      %s107 = ssub.s32 %s29, %s48
      %s108 = ssub.s32 %s31, %s40
      %s109 = sor.u32 %s107, %s108
      %p110 = scmp.eq.s32.totalorder %s109, 0
      %s112 = sadd.s32 %s111, 1
      %s113 = scalar_select %p110, %s111, %s112
      %p116 = pneg %p110
      %p117 = scmp.eq.s32.totalorder %s22, 1
      %p118 = por %p116, %p117
      %p119 = scmp.ne.s32.totalorder %s111, %s114
      %p120 = scmp.eq.s32.totalorder %s22, 0
      %p121 = por %p119, %p120
      %p122 = scmp.ne.s32.totalorder %s111, %s114
      %p123 = scmp.eq.s32.totalorder %s27, 1
      %p124 = por %p122, %p123
      %p125 = scmp.ne.s32.totalorder %s114, %s115
      %p126 = scmp.eq.s32.totalorder %s27, 0
      %p127 = por %p125, %p126
      %p128 = scmp.ne.s32.totalorder %s114, %s115
      %p129 = scmp.eq.s32.totalorder %s28, 1
      %p130 = por %p128, %p129
      %p132 = scmp.ne.s32.totalorder %s115, %s131
      %p133 = scmp.eq.s32.totalorder %s28, 0
      %p134 = por %p132, %p133
      %s136 = sadd.s32 %s135, 1
      %p139 = scmp.eq.s32.totalorder %s22, 1
      %p140 = scmp.ne.s32.totalorder %s135, %s137
      %p141 = scmp.eq.s32.totalorder %s22, 0
      %p142 = por %p140, %p141
      %p143 = scmp.ne.s32.totalorder %s135, %s137
      %p144 = scmp.eq.s32.totalorder %s27, 1
      %p145 = por %p143, %p144
      %p146 = scmp.ne.s32.totalorder %s137, %s138
      %p147 = scmp.eq.s32.totalorder %s27, 0
      %p148 = por %p146, %p147
      %p149 = scmp.ne.s32.totalorder %s137, %s138
      %p150 = scmp.eq.s32.totalorder %s28, 1
      %p151 = por %p149, %p150
      %p153 = scmp.ne.s32.totalorder %s138, %s152
      %p154 = scmp.eq.s32.totalorder %s28, 0
      %p155 = por %p153, %p154
      %s157 = sadd.s32 %s156, 1
      %p160 = scmp.eq.s32.totalorder %s22, 1
      %p161 = scmp.ne.s32.totalorder %s156, %s158
      %p162 = scmp.eq.s32.totalorder %s22, 0
      %p163 = por %p161, %p162
      %p164 = scmp.ne.s32.totalorder %s156, %s158
      %p165 = scmp.eq.s32.totalorder %s27, 1
      %p166 = por %p164, %p165
      %p167 = scmp.ne.s32.totalorder %s158, %s159
      %p168 = scmp.eq.s32.totalorder %s27, 0
      %p169 = por %p167, %p168
      %p170 = scmp.ne.s32.totalorder %s158, %s159
      %p171 = scmp.eq.s32.totalorder %s28, 1
      %p172 = por %p170, %p171
      %p174 = scmp.ne.s32.totalorder %s159, %s173
      %p175 = scmp.eq.s32.totalorder %s28, 0
      %p176 = por %p174, %p175
      %s177 = ssub.s32 %s29, %s48
      %s178 = ssub.s32 %s30, %s44
      %s179 = sor.u32 %s177, %s178
      %p180 = scmp.eq.s32.totalorder %s179, 0
      %s182 = sadd.s32 %s181, 1
      %s183 = scalar_select %p180, %s181, %s182
      %p186 = pneg %p180
      %p187 = scmp.eq.s32.totalorder %s22, 1
      %p188 = por %p186, %p187
      %p189 = scmp.ne.s32.totalorder %s181, %s184
      %p190 = scmp.eq.s32.totalorder %s22, 0
      %p191 = por %p189, %p190
      %p192 = scmp.ne.s32.totalorder %s181, %s184
      %p193 = scmp.eq.s32.totalorder %s27, 1
      %p194 = por %p192, %p193
      %p195 = scmp.ne.s32.totalorder %s184, %s185
      %p196 = scmp.eq.s32.totalorder %s27, 0
      %p197 = por %p195, %p196
      %p198 = scmp.ne.s32.totalorder %s184, %s185
      %p199 = scmp.eq.s32.totalorder %s28, 1
      %p200 = por %p198, %p199
      %p202 = scmp.ne.s32.totalorder %s185, %s201
      %p203 = scmp.eq.s32.totalorder %s28, 0
      %p204 = por %p202, %p203
      %s205 = ssub.s32 %s29, %s48
      %s206 = ssub.s32 %s30, %s44
      %s207 = sor.u32 %s205, %s206
      %p208 = scmp.eq.s32.totalorder %s207, 0
      %s210 = sadd.s32 %s209, 1
      %s211 = scalar_select %p208, %s209, %s210
      %p214 = pneg %p208
      %p215 = scmp.eq.s32.totalorder %s22, 1
      %p216 = por %p214, %p215
      %p217 = scmp.ne.s32.totalorder %s209, %s212
      %p218 = scmp.eq.s32.totalorder %s22, 0
      %p219 = por %p217, %p218
      %p220 = scmp.ne.s32.totalorder %s209, %s212
      %p221 = scmp.eq.s32.totalorder %s27, 1
      %p222 = por %p220, %p221
      %p223 = scmp.ne.s32.totalorder %s212, %s213
      %p224 = scmp.eq.s32.totalorder %s27, 0
      %p225 = por %p223, %p224
      %p226 = scmp.ne.s32.totalorder %s212, %s213
      %p227 = scmp.eq.s32.totalorder %s28, 1
      %p228 = por %p226, %p227
      %p230 = scmp.ne.s32.totalorder %s213, %s229
      %p231 = scmp.eq.s32.totalorder %s28, 0
      %p232 = por %p230, %p231
      %p233 = scmp.le.s32.totalorder 1, %s22
      %p234 = scmp.lt.s32.totalorder %s22, 3
      %p235 = pnand %p233, %p234
      %p236 = pneg %p235
      // Predicated region
      $region9: #{tpu_custom_call.1} parent=5 // pred_check
        _
      $region10: #{tpu_custom_call.1} parent=5 // pred_check_branch
        %238 = sbr.rel (%p235) target = $region12
      $region11: #{tpu_custom_call.1} parent=5 // pred_region
        %s239 = ssub.s32 %s22, 1
        // Predicated region
        $region13: #{tpu_custom_call.1} parent=11 // pred_check
          %p240 = pneg %p148
        $region14: #{tpu_custom_call.1} parent=11 // pred_check_branch
          %242 = sbr.rel (%p240) target = $region16
        $region15: #{tpu_custom_call.1} parent=11 // pred_region
          %244 = vsyncadd [#allocation10], 0
          %s245 = sshll.u32 %s3, 4
          %s246 = int_to_ptr.hbm [resolvable:$true] %s245
          %s247 = sshll.u32 [#allocation9], 4
          %s248 = int_to_ptr.vmem [resolvable:$true] %s247
          %253 = dma.hbm_to_vmem [thread:$0]  %s246, 512, %s248, [#allocation10], 128, 128, 8
        $region16: #{tpu_custom_call.1} parent=11 // pred_fallthru
          _
        // Predicated region
        $region17: #{tpu_custom_call.1} parent=11 // pred_check
          %p254 = pneg %p169
        $region18: #{tpu_custom_call.1} parent=11 // pred_check_branch
          %256 = sbr.rel (%p254) target = $region20
        $region19: #{tpu_custom_call.1} parent=11 // pred_region
          %258 = vsyncadd [#allocation10], 0
          %s260 = sshll.u32 %s4, 4
          %s261 = int_to_ptr.hbm [resolvable:$true] %s260
          %s262 = sshll.u32 [#allocation11], 4
          %s263 = int_to_ptr.vmem [resolvable:$true] %s262
          %265 = dma.hbm_to_vmem [thread:$0]  %s261, 16, %s263, [#allocation10]
        $region20: #{tpu_custom_call.1} parent=11 // pred_fallthru
          _
      $region12: #{tpu_custom_call.1} parent=5 // pred_fallthru
        _
      %p266 = scmp.lt.s32.totalorder %s22, 2
      // Predicated region
      $region21: #{tpu_custom_call.1} parent=5 // pred_check
        %p267 = pneg %p266
      $region22: #{tpu_custom_call.1} parent=5 // pred_check_branch
        %269 = sbr.rel (%p267) target = $region24
      $region23: #{tpu_custom_call.1} parent=5 // pred_region
        // Predicated region
        $region25: #{tpu_custom_call.1} parent=23 // pred_check
          %p270 = pneg %p65
        $region26: #{tpu_custom_call.1} parent=23 // pred_check_branch
          %272 = sbr.rel (%p270) target = $region28
        $region27: #{tpu_custom_call.1} parent=23 // pred_region
          %s273 = sand.u32 %s55, 1
          %s274 = scalar_lea.sflag [#allocation4], %s273
          %s275 = sand.u32 %s55, 1
          %s276 = smul.addr %s275, 32
          %s277 = scalar_lea.vmem [#allocation3], %s276
          %s278 = smul.u32 4, %s31
          %280 = vsyncadd %s274, 0
          %s281 = sadd.s32 %s30, %s278
          %s282 = smul.addr %s29, 4
          %s283 = sadd.s32 %s281, %s282
          %s284 = smul.addr %s283, 8
          %s285 = scalar_lea.hbm %s0, %s284
          %s286 = sshll.u32 %s285, 4
          %s287 = int_to_ptr.hbm [resolvable:$true] %s286
          %s288 = sshll.u32 %s277, 4
          %s289 = int_to_ptr.vmem [resolvable:$true] %s288
          %294 = dma.hbm_to_vmem [thread:$0]  %s287, 512, %s289, %s274, 128, 128, 8
        $region28: #{tpu_custom_call.1} parent=23 // pred_fallthru
          _
        // Predicated region
        $region29: #{tpu_custom_call.1} parent=23 // pred_check
          %p295 = pneg %p93
        $region30: #{tpu_custom_call.1} parent=23 // pred_check_branch
          %297 = sbr.rel (%p295) target = $region32
        $region31: #{tpu_custom_call.1} parent=23 // pred_region
          %s298 = sand.u32 %s22, 1
          %s299 = scalar_lea.sflag [#allocation7], %s298
          %s300 = sand.u32 %s83, 1
          %s301 = smul.addr %s300, 32
          %s302 = scalar_lea.vmem [#allocation6], %s301
          %s303 = smul.u32 4, %s31
          %305 = vsyncadd %s299, 0
          %s306 = smul.addr %s29, 4
          %s307 = sadd.s32 %s303, %s306
          %s308 = smul.addr %s307, 8
          %s309 = scalar_lea.hbm %s1, %s308
          %s310 = sshll.u32 %s309, 4
          %s311 = int_to_ptr.hbm [resolvable:$true] %s310
          %s312 = sshll.u32 %s302, 4
          %s313 = int_to_ptr.vmem [resolvable:$true] %s312
          %318 = dma.hbm_to_vmem [thread:$0]  %s311, 512, %s313, %s299, 128, 128, 8
        $region32: #{tpu_custom_call.1} parent=23 // pred_fallthru
          _
        // Predicated region
        $region33: #{tpu_custom_call.1} parent=23 // pred_check
          %p319 = pneg %p121
        $region34: #{tpu_custom_call.1} parent=23 // pred_check_branch
          %321 = sbr.rel (%p319) target = $region36
        $region35: #{tpu_custom_call.1} parent=23 // pred_region
          %s322 = sand.u32 %s22, 1
          %s323 = scalar_lea.sflag [#allocation7], %s322
          %s324 = sand.u32 %s111, 1
          %s325 = smul.addr %s324, 32
          %s326 = scalar_lea.vmem [#allocation8], %s325
          %s327 = smul.u32 4, %s31
          %329 = vsyncadd %s323, 0
          %s330 = smul.addr %s29, 4
          %s331 = sadd.s32 %s327, %s330
          %s332 = smul.addr %s331, 8
          %s333 = scalar_lea.hbm %s2, %s332
          %s334 = sshll.u32 %s333, 4
          %s335 = int_to_ptr.hbm [resolvable:$true] %s334
          %s336 = sshll.u32 %s326, 4
          %s337 = int_to_ptr.vmem [resolvable:$true] %s336
          %342 = dma.hbm_to_vmem [thread:$0]  %s335, 512, %s337, %s323, 128, 128, 8
        $region36: #{tpu_custom_call.1} parent=23 // pred_fallthru
          _
        // Predicated region
        $region37: #{tpu_custom_call.1} parent=23 // pred_check
          %p343 = pneg %p191
        $region38: #{tpu_custom_call.1} parent=23 // pred_check_branch
          %345 = sbr.rel (%p343) target = $region40
        $region39: #{tpu_custom_call.1} parent=23 // pred_region
          %p346 = scmp.lt.s32.totalorder %s29, 1
          %s347 = scalar_select %p346, %s29, 1
          %p348 = scmp.lt.s32.totalorder %s30, 0
          %s349 = scalar_select %p348, %s30, 0
          %s350 = sadd.s32 %s349, %s347
          %s351 = smul.addr %s350, 2
          %s352 = scalar_lea.vmem %s5, %s351
        $region40: #{tpu_custom_call.1} parent=23 // pred_fallthru
          _
      $region24: #{tpu_custom_call.1} parent=5 // pred_fallthru
        _
      %p353 = scmp.le.s32.totalorder 1, %s22
      %p354 = scmp.lt.s32.totalorder %s22, 3
      %p355 = pnand %p353, %p354
      %p356 = pneg %p355
      // Predicated region
      $region41: #{tpu_custom_call.1} parent=5 // pred_check
        _
      $region42: #{tpu_custom_call.1} parent=5 // pred_check_branch
        %358 = sbr.rel (%p355) target = $region44
      $region43: #{tpu_custom_call.1} parent=5 // pred_region
        %s359 = ssub.s32 %s22, 1
        %s360 = sand.u32 %s58, 1
        %s361 = scalar_lea.sflag [#allocation4], %s360
        %s362 = sand.u32 %s58, 1
        %s363 = smul.addr %s362, 32
        %s364 = scalar_lea.vmem [#allocation3], %s363
        // Predicated region
        $region45: #{tpu_custom_call.1} parent=43 // pred_check
          %p365 = pneg %p71
        $region46: #{tpu_custom_call.1} parent=43 // pred_check_branch
          %367 = sbr.rel (%p365) target = $region48
        $region47: #{tpu_custom_call.1} parent=43 // pred_region
          %369 = dma.done %s361, 512
        $region48: #{tpu_custom_call.1} parent=43 // pred_fallthru
          _
        %s370 = sand.u32 %s27, 1
        %s371 = scalar_lea.sflag [#allocation7], %s370
        %s372 = sand.u32 %s86, 1
        %s373 = smul.addr %s372, 32
        %s374 = scalar_lea.vmem [#allocation6], %s373
        // Predicated region
        $region49: #{tpu_custom_call.1} parent=43 // pred_check
          %p375 = pneg %p99
        $region50: #{tpu_custom_call.1} parent=43 // pred_check_branch
          %377 = sbr.rel (%p375) target = $region52
        $region51: #{tpu_custom_call.1} parent=43 // pred_region
          %379 = dma.done %s371, 512
        $region52: #{tpu_custom_call.1} parent=43 // pred_fallthru
          _
        %s380 = sand.u32 %s27, 1
        %s381 = scalar_lea.sflag [#allocation7], %s380
        %s382 = sand.u32 %s114, 1
        %s383 = smul.addr %s382, 32
        %s384 = scalar_lea.vmem [#allocation8], %s383
        // Predicated region
        $region53: #{tpu_custom_call.1} parent=43 // pred_check
          %p385 = pneg %p127
        $region54: #{tpu_custom_call.1} parent=43 // pred_check_branch
          %387 = sbr.rel (%p385) target = $region56
        $region55: #{tpu_custom_call.1} parent=43 // pred_region
          %389 = dma.done %s381, 512
        $region56: #{tpu_custom_call.1} parent=43 // pred_fallthru
          _
        // Predicated region
        $region57: #{tpu_custom_call.1} parent=43 // pred_check
          %p390 = pneg %p148
        $region58: #{tpu_custom_call.1} parent=43 // pred_check_branch
          %392 = sbr.rel (%p390) target = $region60
        $region59: #{tpu_custom_call.1} parent=43 // pred_region
          %394 = dma.done [#allocation10], 512
        $region60: #{tpu_custom_call.1} parent=43 // pred_fallthru
          _
        // Predicated region
        $region61: #{tpu_custom_call.1} parent=43 // pred_check
          %p395 = pneg %p169
        $region62: #{tpu_custom_call.1} parent=43 // pred_check_branch
          %397 = sbr.rel (%p395) target = $region64
        $region63: #{tpu_custom_call.1} parent=43 // pred_region
          %399 = dma.done [#allocation10], 16
        $region64: #{tpu_custom_call.1} parent=43 // pred_fallthru
          _
        %s400 = sand.u32 %s58, 1
        %s401 = scalar_lea.sflag [#allocation4], %s400
        %s402 = sand.u32 %s58, 1
        %s403 = smul.addr %s402, 32
        %s404 = scalar_lea.vmem [#allocation3], %s403
        %p405 = pneg %p71
        %p406 = pneg %p68
        %s407 = sand.u32 %s27, 1
        %s408 = scalar_lea.sflag [#allocation7], %s407
        %s409 = sand.u32 %s86, 1
        %s410 = smul.addr %s409, 32
        %s411 = scalar_lea.vmem [#allocation6], %s410
        %p412 = pneg %p99
        %p413 = pneg %p96
        %s414 = sand.u32 %s27, 1
        %s415 = scalar_lea.sflag [#allocation7], %s414
        %s416 = sand.u32 %s114, 1
        %s417 = smul.addr %s416, 32
        %s418 = scalar_lea.vmem [#allocation8], %s417
        %p419 = pneg %p127
        %p420 = pneg %p124
        %p421 = pneg %p148
        %p422 = pneg %p145
        %p423 = pneg %p169
        %p424 = pneg %p166
        %p425 = scmp.lt.s32.totalorder %s32, 1
        %s426 = scalar_select %p425, %s32, 1
        %p427 = scmp.lt.s32.totalorder %s33, 0
        %s428 = scalar_select %p427, %s33, 0
        %s429 = sadd.s32 %s428, %s426
        %s430 = smul.addr %s429, 2
        %s431 = scalar_lea.vmem %s5, %s430
        %p432 = pneg %p197
        %p433 = pneg %p194
        %p434 = pneg %p225
        %p435 = pneg %p222
        %s436 = sand.u32 %s212, 1
        %s437 = scalar_lea.sflag [#allocation5], %s436
        %s438 = sand.u32 %s212, 1
        %s439 = smul.addr %s438, 8
        %s440 = scalar_lea.vmem [#allocation12], %s439
        %s441 = smul.u32 4, %s34
        %s442 = smul.u32 4, %s34
        %s443 = smul.u32 4, %s34
        %p444 = scmp.lt.s32.totalorder %s32, 1
        %s445 = scalar_select %p444, %s32, 1
        %p446 = scmp.lt.s32.totalorder %s33, 0
        %s447 = scalar_select %p446, %s33, 0
        %s448 = sadd.s32 %s447, %s445
        %s449 = smul.addr %s448, 2
        %s450 = scalar_lea.vmem %s5, %s449
        %p451 = scmp.eq.s32.totalorder %s34, 0
        // Predicated region
        $region65: #{tpu_custom_call.1} parent=43 // pred_check
          %p452 = pneg %p451
        $region66: #{tpu_custom_call.1} parent=43 // pred_check_branch
          %454 = sbr.rel (%p452) target = $region68
        $region67: #{tpu_custom_call.1} parent=43 // pred_region
          %vm455 = vcmask 261120
          %456 = vst.msk [vmem:[#allocation2] sm:$0xff] %vm455, 0.0
        $region68: #{tpu_custom_call.1} parent=43 // pred_fallthru
          _
        %v457 = vld [vmem:[%s450] sm:$0x3]
        %v458 = vunpack.c.0.s8 %v457
        %v459 = vcvt.s32.f32 %v458
        %vm460 = vcmp.eq.f32.partialorder %v459, 0.0
        %v461 = vsel %vm460, -1e+09, 0.0
        %v462 = vld [vmem:[%s364] sm:$0xff]
        %v463 = vld [vmem:[%s364 + $0x8] sm:$0xff]
        %v464 = vld [vmem:[%s364 + $0x10] sm:$0xff]
        %v465 = vld [vmem:[%s364 + $0x18] sm:$0xff]
        %v466 = vld [vmem:[%s374] sm:$0xff]
        %v467 = vld [vmem:[%s374 + $0x8] sm:$0xff]
        %v468 = vld [vmem:[%s374 + $0x10] sm:$0xff]
        %v469 = vld [vmem:[%s374 + $0x18] sm:$0xff]
        %v470 = vld [vmem:[%s384] sm:$0xff]
        %v471 = vld [vmem:[%s384 + $0x8] sm:$0xff]
        %v472 = vld [vmem:[%s384 + $0x10] sm:$0xff]
        %v473 = vld [vmem:[%s384 + $0x18] sm:$0xff]
        %vm474 = vcmask 64512
        %v476 = vsel %vm474, %v462, 0
        %478 = vmatpush.msra.mxu0 0.0
        %479 = vmatpush.msra.mxu0 0.0
        %480 = vmatpush.msra.mxu0 0.0
        %481 = vmatpush.msra.mxu0 0.0
        %482 = vmatpush.msra.mxu0 0.0
        %483 = vmatpush.msra.mxu0 0.0
        %484 = vmatpush.msra.mxu0 0.0
        %485 = vmatpush.msra.mxu0 0.0
        %486 = vmatpush.msra.mxu0 0.0
        %487 = vmatpush.msra.mxu0 0.0
        %488 = vmatpush.msra.mxu0 0.0
        %489 = vmatpush.msra.mxu0 0.0
        %490 = vmatpush.msra.mxu0 0.0
        %491 = vmatpush.msra.mxu0 0.0
        %492 = vmatpush.msra.mxu0 0.0
        %493 = vmatpush.msra.mxu0 %v466
        %494 = vmatmul.f32.gmra.mxu0 %v476
        %v495 = vpop.f32.mrf.mxu0
        %v496 = vadd.f32 %v461, %v495
        %497 = vdwg.mxu0
        %v499 = vsel %vm474, %v463, 0
        %501 = vmatpush.msra.mxu0 0.0
        %502 = vmatpush.msra.mxu0 0.0
        %503 = vmatpush.msra.mxu0 0.0
        %504 = vmatpush.msra.mxu0 0.0
        %505 = vmatpush.msra.mxu0 0.0
        %506 = vmatpush.msra.mxu0 0.0
        %507 = vmatpush.msra.mxu0 0.0
        %508 = vmatpush.msra.mxu0 0.0
        %509 = vmatpush.msra.mxu0 0.0
        %510 = vmatpush.msra.mxu0 0.0
        %511 = vmatpush.msra.mxu0 0.0
        %512 = vmatpush.msra.mxu0 0.0
        %513 = vmatpush.msra.mxu0 0.0
        %514 = vmatpush.msra.mxu0 0.0
        %515 = vmatpush.msra.mxu0 0.0
        %516 = vmatpush.msra.mxu0 %v467
        %517 = vmatmul.f32.gmra.mxu0 %v499
        %v518 = vpop.f32.mrf.mxu0
        %v519 = vadd.f32 %v461, %v518
        %520 = vdwg.mxu0
        %v522 = vsel %vm474, %v464, 0
        %524 = vmatpush.msra.mxu0 0.0
        %525 = vmatpush.msra.mxu0 0.0
        %526 = vmatpush.msra.mxu0 0.0
        %527 = vmatpush.msra.mxu0 0.0
        %528 = vmatpush.msra.mxu0 0.0
        %529 = vmatpush.msra.mxu0 0.0
        %530 = vmatpush.msra.mxu0 0.0
        %531 = vmatpush.msra.mxu0 0.0
        %532 = vmatpush.msra.mxu0 0.0
        %533 = vmatpush.msra.mxu0 0.0
        %534 = vmatpush.msra.mxu0 0.0
        %535 = vmatpush.msra.mxu0 0.0
        %536 = vmatpush.msra.mxu0 0.0
        %537 = vmatpush.msra.mxu0 0.0
        %538 = vmatpush.msra.mxu0 0.0
        %539 = vmatpush.msra.mxu0 %v468
        %540 = vmatmul.f32.gmra.mxu0 %v522
        %v541 = vpop.f32.mrf.mxu0
        %v542 = vadd.f32 %v461, %v541
        %543 = vdwg.mxu0
        %v545 = vsel %vm474, %v465, 0
        %547 = vmatpush.msra.mxu0 0.0
        %548 = vmatpush.msra.mxu0 0.0
        %549 = vmatpush.msra.mxu0 0.0
        %550 = vmatpush.msra.mxu0 0.0
        %551 = vmatpush.msra.mxu0 0.0
        %552 = vmatpush.msra.mxu0 0.0
        %553 = vmatpush.msra.mxu0 0.0
        %554 = vmatpush.msra.mxu0 0.0
        %555 = vmatpush.msra.mxu0 0.0
        %556 = vmatpush.msra.mxu0 0.0
        %557 = vmatpush.msra.mxu0 0.0
        %558 = vmatpush.msra.mxu0 0.0
        %559 = vmatpush.msra.mxu0 0.0
        %560 = vmatpush.msra.mxu0 0.0
        %561 = vmatpush.msra.mxu0 0.0
        %562 = vmatpush.msra.mxu0 %v469
        %563 = vmatmul.f32.gmra.mxu0 %v545
        %v564 = vpop.f32.mrf.mxu0
        %v565 = vadd.f32 %v461, %v564
        %566 = vdwg.mxu0
        %v567 = vsel %vm474, %v496, -inf
        %568 = vmax.xlane.f32.xlu0 %v567
        %v569 = vpop.xlane.xlu0 %568
        %v570 = vsel %vm474, %v519, -inf
        %571 = vmax.xlane.f32.xlu0 %v570
        %v572 = vpop.xlane.xlu0 %571
        %v573 = vsel %vm474, %v542, -inf
        %574 = vmax.xlane.f32.xlu0 %v573
        %v575 = vpop.xlane.xlu0 %574
        %v576 = vsel %vm474, %v565, -inf
        %577 = vmax.xlane.f32.xlu0 %v576
        %v578 = vpop.xlane.xlu0 %577
        %v579 = vsub.f32 %v496, %v569
        %v580 = vsub.f32 %v519, %v572
        %v581 = vsub.f32 %v542, %v575
        %v582 = vsub.f32 %v565, %v578
        %v583 = vmul.f32 %v579, 1.442695
        %v584 = vpow.pop %v583
        %v585 = vmul.f32 %v580, 1.442695
        %v586 = vpow.pop %v585
        %v587 = vmul.f32 %v581, 1.442695
        %v588 = vpow.pop %v587
        %v589 = vmul.f32 %v582, 1.442695
        %v590 = vpow.pop %v589
        %v591 = vsel %vm474, %v584, 0.0
        %592 = vadd.xlane.f32.xlu0 %v591
        %v593 = vpop.xlane.xlu0 %592
        %v594 = vsel %vm474, %v586, 0.0
        %595 = vadd.xlane.f32.xlu0 %v594
        %v596 = vpop.xlane.xlu0 %595
        %v597 = vsel %vm474, %v588, 0.0
        %598 = vadd.xlane.f32.xlu0 %v597
        %v599 = vpop.xlane.xlu0 %598
        %v600 = vsel %vm474, %v590, 0.0
        %601 = vadd.xlane.f32.xlu0 %v600
        %v602 = vpop.xlane.xlu0 %601
        %v604 = vsel %vm474, %v584, 0
        %606 = vmatpush.msra.mxu0 0.0
        %607 = vmatpush.msra.mxu0 0.0
        %608 = vmatpush.msra.mxu0 0.0
        %609 = vmatpush.msra.mxu0 0.0
        %610 = vmatpush.msra.mxu0 0.0
        %611 = vmatpush.msra.mxu0 0.0
        %612 = vmatpush.msra.mxu0 0.0
        %613 = vmatpush.msra.mxu0 0.0
        %614 = vmatpush.msra.mxu0 0.0
        %615 = vmatpush.msra.mxu0 0.0
        %616 = vmatpush.msra.mxu0 0.0
        %617 = vmatpush.msra.mxu0 0.0
        %618 = vmatpush.msra.mxu0 0.0
        %619 = vmatpush.msra.mxu0 0.0
        %620 = vmatpush.msra.mxu0 0.0
        %621 = vmatpush.msra.mxu0 %v470
        %622 = vmatmul.f32.gmra.mxu0 %v604
        %v623 = vpop.f32.mrf.mxu0
        %v624 = vadd.f32 0.0, %v623
        %625 = vdwg.mxu0
        %v627 = vsel %vm474, %v586, 0
        %629 = vmatpush.msra.mxu0 0.0
        %630 = vmatpush.msra.mxu0 0.0
        %631 = vmatpush.msra.mxu0 0.0
        %632 = vmatpush.msra.mxu0 0.0
        %633 = vmatpush.msra.mxu0 0.0
        %634 = vmatpush.msra.mxu0 0.0
        %635 = vmatpush.msra.mxu0 0.0
        %636 = vmatpush.msra.mxu0 0.0
        %637 = vmatpush.msra.mxu0 0.0
        %638 = vmatpush.msra.mxu0 0.0
        %639 = vmatpush.msra.mxu0 0.0
        %640 = vmatpush.msra.mxu0 0.0
        %641 = vmatpush.msra.mxu0 0.0
        %642 = vmatpush.msra.mxu0 0.0
        %643 = vmatpush.msra.mxu0 0.0
        %644 = vmatpush.msra.mxu0 %v471
        %645 = vmatmul.f32.gmra.mxu0 %v627
        %v646 = vpop.f32.mrf.mxu0
        %v647 = vadd.f32 0.0, %v646
        %648 = vdwg.mxu0
        %v650 = vsel %vm474, %v588, 0
        %652 = vmatpush.msra.mxu0 0.0
        %653 = vmatpush.msra.mxu0 0.0
        %654 = vmatpush.msra.mxu0 0.0
        %655 = vmatpush.msra.mxu0 0.0
        %656 = vmatpush.msra.mxu0 0.0
        %657 = vmatpush.msra.mxu0 0.0
        %658 = vmatpush.msra.mxu0 0.0
        %659 = vmatpush.msra.mxu0 0.0
        %660 = vmatpush.msra.mxu0 0.0
        %661 = vmatpush.msra.mxu0 0.0
        %662 = vmatpush.msra.mxu0 0.0
        %663 = vmatpush.msra.mxu0 0.0
        %664 = vmatpush.msra.mxu0 0.0
        %665 = vmatpush.msra.mxu0 0.0
        %666 = vmatpush.msra.mxu0 0.0
        %667 = vmatpush.msra.mxu0 %v472
        %668 = vmatmul.f32.gmra.mxu0 %v650
        %v669 = vpop.f32.mrf.mxu0
        %v670 = vadd.f32 0.0, %v669
        %671 = vdwg.mxu0
        %v673 = vsel %vm474, %v590, 0
        %675 = vmatpush.msra.mxu0 0.0
        %676 = vmatpush.msra.mxu0 0.0
        %677 = vmatpush.msra.mxu0 0.0
        %678 = vmatpush.msra.mxu0 0.0
        %679 = vmatpush.msra.mxu0 0.0
        %680 = vmatpush.msra.mxu0 0.0
        %681 = vmatpush.msra.mxu0 0.0
        %682 = vmatpush.msra.mxu0 0.0
        %683 = vmatpush.msra.mxu0 0.0
        %684 = vmatpush.msra.mxu0 0.0
        %685 = vmatpush.msra.mxu0 0.0
        %686 = vmatpush.msra.mxu0 0.0
        %687 = vmatpush.msra.mxu0 0.0
        %688 = vmatpush.msra.mxu0 0.0
        %689 = vmatpush.msra.mxu0 0.0
        %690 = vmatpush.msra.mxu0 %v473
        %691 = vmatmul.f32.gmra.mxu0 %v673
        %v692 = vpop.f32.mrf.mxu0
        %v693 = vadd.f32 0.0, %v692
        %694 = vdwg.mxu0
        %v695 = vrcp.pop %v593
        %v696 = vmul.f32 %v593, %v695
        %v697 = vsub.f32 1.0, %v696
        %v698 = vmul.f32 %v695, %v697
        %v699 = vadd.f32 %v695, %v698
        %vm700 = vweird.f32 %v593
        %vm701 = vweird.f32 %v695
        %vm702 = vmor %vm700, %vm701
        %v703 = vsel %vm702, %v695, %v699
        %v704 = vand.u32 2147483647, %v593
        %vm705 = vcmp.eq.f32.partialorder %v704, 8.507059e+37
        %v706 = vand.u32 %v593, 2147483648
        %v707 = vor.u32 1.1754944e-38, %v706
        %v708 = vsel %vm705, %v707, %v703
        %v709 = vmul.f32 1.0, %v708
        %v710 = vrcp.pop %v596
        %v711 = vmul.f32 %v596, %v710
        %v712 = vsub.f32 1.0, %v711
        %v713 = vmul.f32 %v710, %v712
        %v714 = vadd.f32 %v710, %v713
        %vm715 = vweird.f32 %v596
        %vm716 = vweird.f32 %v710
        %vm717 = vmor %vm715, %vm716
        %v718 = vsel %vm717, %v710, %v714
        %v719 = vand.u32 2147483647, %v596
        %vm720 = vcmp.eq.f32.partialorder %v719, 8.507059e+37
        %v721 = vand.u32 %v596, 2147483648
        %v722 = vor.u32 1.1754944e-38, %v721
        %v723 = vsel %vm720, %v722, %v718
        %v724 = vmul.f32 1.0, %v723
        %v725 = vrcp.pop %v599
        %v726 = vmul.f32 %v599, %v725
        %v727 = vsub.f32 1.0, %v726
        %v728 = vmul.f32 %v725, %v727
        %v729 = vadd.f32 %v725, %v728
        %vm730 = vweird.f32 %v599
        %vm731 = vweird.f32 %v725
        %vm732 = vmor %vm730, %vm731
        %v733 = vsel %vm732, %v725, %v729
        %v734 = vand.u32 2147483647, %v599
        %vm735 = vcmp.eq.f32.partialorder %v734, 8.507059e+37
        %v736 = vand.u32 %v599, 2147483648
        %v737 = vor.u32 1.1754944e-38, %v736
        %v738 = vsel %vm735, %v737, %v733
        %v739 = vmul.f32 1.0, %v738
        %v740 = vrcp.pop %v602
        %v741 = vmul.f32 %v602, %v740
        %v742 = vsub.f32 1.0, %v741
        %v743 = vmul.f32 %v740, %v742
        %v744 = vadd.f32 %v740, %v743
        %vm745 = vweird.f32 %v602
        %vm746 = vweird.f32 %v740
        %vm747 = vmor %vm745, %vm746
        %v748 = vsel %vm747, %v740, %v744
        %v749 = vand.u32 2147483647, %v602
        %vm750 = vcmp.eq.f32.partialorder %v749, 8.507059e+37
        %v751 = vand.u32 %v602, 2147483648
        %v752 = vor.u32 1.1754944e-38, %v751
        %v753 = vsel %vm750, %v752, %v748
        %v754 = vmul.f32 1.0, %v753
        %v755 = vmul.f32 %v624, %v709
        %v756 = vmul.f32 %v647, %v724
        %v757 = vmul.f32 %v670, %v739
        %v758 = vmul.f32 %v693, %v754
        %v759 = vld [vmem:[#allocation2] sm:$0xff]
        %s760 = smul.u32 %s34, 4
        %s761 = smul.u32 %s760, 8
        %s762 = scalar_lea.vmem [#allocation9], %s761
        %v763 = vld [vmem:[%s762] sm:$0xff]
        %v765 = vsel %vm474, %v755, 0
        %767 = vmatpush.msra.mxu0 0.0
        %768 = vmatpush.msra.mxu0 0.0
        %769 = vmatpush.msra.mxu0 0.0
        %770 = vmatpush.msra.mxu0 0.0
        %771 = vmatpush.msra.mxu0 0.0
        %772 = vmatpush.msra.mxu0 0.0
        %773 = vmatpush.msra.mxu0 0.0
        %774 = vmatpush.msra.mxu0 0.0
        %775 = vmatpush.msra.mxu0 0.0
        %776 = vmatpush.msra.mxu0 0.0
        %777 = vmatpush.msra.mxu0 0.0
        %778 = vmatpush.msra.mxu0 0.0
        %779 = vmatpush.msra.mxu0 0.0
        %780 = vmatpush.msra.mxu0 0.0
        %781 = vmatpush.msra.mxu0 0.0
        %782 = vmatpush.msra.mxu0 %v763
        %783 = vmatmul.f32.gmra.mxu0 %v765
        %v784 = vpop.f32.mrf.mxu0
        %v785 = vadd.f32 0.0, %v784
        %786 = vdwg.mxu0
        %v787 = vadd.f32 %v759, %v785
        %vm788 = vcmask 261120
        %789 = vst.msk [vmem:[#allocation2] sm:$0xff] %vm788, %v787
        %v790 = vld [vmem:[#allocation2] sm:$0xff]
        %s791 = sadd.s32 %s760, 1
        %s792 = smul.u32 %s791, 8
        %s793 = scalar_lea.vmem [#allocation9], %s792
        %v794 = vld [vmem:[%s793] sm:$0xff]
        %v796 = vsel %vm474, %v756, 0
        %798 = vmatpush.msra.mxu0 0.0
        %799 = vmatpush.msra.mxu0 0.0
        %800 = vmatpush.msra.mxu0 0.0
        %801 = vmatpush.msra.mxu0 0.0
        %802 = vmatpush.msra.mxu0 0.0
        %803 = vmatpush.msra.mxu0 0.0
        %804 = vmatpush.msra.mxu0 0.0
        %805 = vmatpush.msra.mxu0 0.0
        %806 = vmatpush.msra.mxu0 0.0
        %807 = vmatpush.msra.mxu0 0.0
        %808 = vmatpush.msra.mxu0 0.0
        %809 = vmatpush.msra.mxu0 0.0
        %810 = vmatpush.msra.mxu0 0.0
        %811 = vmatpush.msra.mxu0 0.0
        %812 = vmatpush.msra.mxu0 0.0
        %813 = vmatpush.msra.mxu0 %v794
        %814 = vmatmul.f32.gmra.mxu0 %v796
        %v815 = vpop.f32.mrf.mxu0
        %v816 = vadd.f32 0.0, %v815
        %817 = vdwg.mxu0
        %v818 = vadd.f32 %v790, %v816
        %819 = vst.msk [vmem:[#allocation2] sm:$0xff] %vm788, %v818
        %v820 = vld [vmem:[#allocation2] sm:$0xff]
        %s821 = sadd.s32 %s760, 2
        %s822 = smul.u32 %s821, 8
        %s823 = scalar_lea.vmem [#allocation9], %s822
        %v824 = vld [vmem:[%s823] sm:$0xff]
        %v826 = vsel %vm474, %v757, 0
        %828 = vmatpush.msra.mxu0 0.0
        %829 = vmatpush.msra.mxu0 0.0
        %830 = vmatpush.msra.mxu0 0.0
        %831 = vmatpush.msra.mxu0 0.0
        %832 = vmatpush.msra.mxu0 0.0
        %833 = vmatpush.msra.mxu0 0.0
        %834 = vmatpush.msra.mxu0 0.0
        %835 = vmatpush.msra.mxu0 0.0
        %836 = vmatpush.msra.mxu0 0.0
        %837 = vmatpush.msra.mxu0 0.0
        %838 = vmatpush.msra.mxu0 0.0
        %839 = vmatpush.msra.mxu0 0.0
        %840 = vmatpush.msra.mxu0 0.0
        %841 = vmatpush.msra.mxu0 0.0
        %842 = vmatpush.msra.mxu0 0.0
        %843 = vmatpush.msra.mxu0 %v824
        %844 = vmatmul.f32.gmra.mxu0 %v826
        %v845 = vpop.f32.mrf.mxu0
        %v846 = vadd.f32 0.0, %v845
        %847 = vdwg.mxu0
        %v848 = vadd.f32 %v820, %v846
        %849 = vst.msk [vmem:[#allocation2] sm:$0xff] %vm788, %v848
        %v850 = vld [vmem:[#allocation2] sm:$0xff]
        %s851 = sadd.s32 %s760, 3
        %s852 = smul.u32 %s851, 8
        %s853 = scalar_lea.vmem [#allocation9], %s852
        %v854 = vld [vmem:[%s853] sm:$0xff]
        %v856 = vsel %vm474, %v758, 0
        %858 = vmatpush.msra.mxu0 0.0
        %859 = vmatpush.msra.mxu0 0.0
        %860 = vmatpush.msra.mxu0 0.0
        %861 = vmatpush.msra.mxu0 0.0
        %862 = vmatpush.msra.mxu0 0.0
        %863 = vmatpush.msra.mxu0 0.0
        %864 = vmatpush.msra.mxu0 0.0
        %865 = vmatpush.msra.mxu0 0.0
        %866 = vmatpush.msra.mxu0 0.0
        %867 = vmatpush.msra.mxu0 0.0
        %868 = vmatpush.msra.mxu0 0.0
        %869 = vmatpush.msra.mxu0 0.0
        %870 = vmatpush.msra.mxu0 0.0
        %871 = vmatpush.msra.mxu0 0.0
        %872 = vmatpush.msra.mxu0 0.0
        %873 = vmatpush.msra.mxu0 %v854
        %874 = vmatmul.f32.gmra.mxu0 %v856
        %v875 = vpop.f32.mrf.mxu0
        %v876 = vadd.f32 0.0, %v875
        %877 = vdwg.mxu0
        %v878 = vadd.f32 %v850, %v876
        %879 = vst.msk [vmem:[#allocation2] sm:$0xff] %vm788, %v878
        // Predicated region
        $region69: #{tpu_custom_call.1} parent=43 // pred_check
          %p880 = pneg %p451
        $region70: #{tpu_custom_call.1} parent=43 // pred_check_branch
          %882 = sbr.rel (%p880) target = $region72
        $region71: #{tpu_custom_call.1} parent=43 // pred_region
          %v883 = vld [vmem:[#allocation2] sm:$0xff]
          %v884 = vld [vmem:[#allocation11] sm:$0x1]
          %v886 = vperm.slane %v884, 0
          %v888 = vadd.f32 %v883, %v886
          %889 = vst.msk [vmem:[%s440] sm:$0xff] %vm788, %v888
        $region72: #{tpu_custom_call.1} parent=43 // pred_fallthru
          _
        %s890 = sand.u32 %s212, 1
        %s891 = scalar_lea.sflag [#allocation5], %s890
        %s892 = sand.u32 %s212, 1
        %s893 = smul.addr %s892, 8
        %s894 = scalar_lea.vmem [#allocation12], %s893
        // Predicated region
        $region73: #{tpu_custom_call.1} parent=43 // pred_check
          %p895 = pneg %p222
        $region74: #{tpu_custom_call.1} parent=43 // pred_check_branch
          %897 = sbr.rel (%p895) target = $region76
        $region75: #{tpu_custom_call.1} parent=43 // pred_region
          %899 = vsyncadd %s891, 0
          %s900 = sadd.s32 %s33, %s32
          %s901 = smul.addr %s900, 8
          %s902 = scalar_lea.hbm %s6, %s901
          %s904 = sshll.u32 %s894, 4
          %s905 = int_to_ptr.vmem [resolvable:$true] %s904
          %s906 = sshll.u32 %s902, 4
          %s907 = int_to_ptr.hbm [resolvable:$true] %s906
          %909 = dma.vmem_to_hbm [thread:$0]  %s905, 128, %s907, %s891
        $region76: #{tpu_custom_call.1} parent=43 // pred_fallthru
          _
      $region44: #{tpu_custom_call.1} parent=5 // pred_fallthru
        _
      %p910 = scmp.le.s32.totalorder 2, %s22
      // Predicated region
      $region77: #{tpu_custom_call.1} parent=5 // pred_check
        %p911 = pneg %p910
      $region78: #{tpu_custom_call.1} parent=5 // pred_check_branch
        %913 = sbr.rel (%p911) target = $region80
      $region79: #{tpu_custom_call.1} parent=5 // pred_region
        %s914 = ssub.s32 %s22, 2
        // Predicated region
        $region81: #{tpu_custom_call.1} parent=79 // pred_check
          %p915 = pneg %p228
        $region82: #{tpu_custom_call.1} parent=79 // pred_check_branch
          %917 = sbr.rel (%p915) target = $region84
        $region83: #{tpu_custom_call.1} parent=79 // pred_region
          %s918 = sand.u32 %s213, 1
          %s919 = scalar_lea.sflag [#allocation5], %s918
          %s920 = sand.u32 %s213, 1
          %s921 = smul.addr %s920, 8
          %s922 = scalar_lea.vmem [#allocation12], %s921
          %924 = dma.done %s919, 128
        $region84: #{tpu_custom_call.1} parent=79 // pred_fallthru
          _
      $region80: #{tpu_custom_call.1} parent=5 // pred_fallthru
        _
    $region6: #{tpu_custom_call.1} parent=1 // loop_footer
      %s26 = sadd.s32 1, %s22
    $region7: #{tpu_custom_call.1} parent=1 // loop_footer_branch
      %21 = sbr.rel target = $region3
    $region8: #{tpu_custom_call.1} parent=1 // loop_exit
      _
    %925 = vsyncpa [#allocation4], 1
    %s926 = scalar_lea.sflag [#allocation4], 1
    %927 = vsyncpa %s926, 1
    %928 = vsyncpa [#allocation7], 1
    %s929 = scalar_lea.sflag [#allocation7], 1
    %930 = vsyncpa %s929, 1
    %931 = vsyncpa [#allocation10], 1
    %932 = vsyncpa [#allocation5], 1
    %s933 = scalar_lea.sflag [#allocation5], 1
    %934 = vsyncpa %s933, 1

</llo_original>
